<compile_context>
chip_gen: v6e
topology: v6e:2x2x1
jax: 0.10.0
libtpu: 0.0.40
codegen_flags: <defaults>
</compile_context>

<pallas_src>
import jax
import jax.numpy as jnp
from jax.experimental import pallas as pl
from jax.experimental.pallas import tpu as pltpu


def _hbm_copy_kernel(q_hbm, o_hbm, sem):
    # Whole-array HBM -> HBM DMA: rides the HBM roofline with zero TC work.
    cp = pltpu.make_async_copy(q_hbm, o_hbm, sem)
    cp.start()
    cp.wait()


def batchless_attention(query_states, key_states, value_states):
    """Pallas implementation of BatchlessAttention.forward.

    forward(q, k, v) -> q  (exact semantics of the PyTorch module).
    key_states / value_states are accepted to mirror the signature but are
    intentionally NOT fed to the pallas_call, so they generate no HBM traffic.
    """
    del key_states, value_states  # unused by the module's forward

    nbytes = query_states.size * query_states.dtype.itemsize

    return pl.pallas_call(
        _hbm_copy_kernel,
        out_shape=jax.ShapeDtypeStruct(query_states.shape, query_states.dtype),
        # Leave both operands in HBM; the kernel issues the DMA itself.
        in_specs=[pl.BlockSpec(memory_space=pl.ANY)],
        out_specs=pl.BlockSpec(memory_space=pl.ANY),
        scratch_shapes=[pltpu.SemaphoreType.DMA],
        cost_estimate=pl.CostEstimate(
            flops=0, transcendentals=0, bytes_accessed=2 * nbytes
        ),
    )(query_states)


if __name__ == "__main__":
    # BatchlessAttention has no parameters (empty __init__), so nothing to init.
    key = jax.random.PRNGKey(0)
    kq, kk, kv = jax.random.split(key, 3)

    B, H, S, D = 2, 4, 8, 32  # small attention-state shapes [B, H, S, D]
    q = jax.random.normal(kq, (B, H, S, D), dtype=jnp.float32)
    k = jax.random.normal(kk, (B, H, S, D), dtype=jnp.float32)
    v = jax.random.normal(kv, (B, H, S, D), dtype=jnp.float32)

    out = batchless_attention(q, k, v)
    out = jax.block_until_ready(out)

    assert out.shape == q.shape and out.dtype == q.dtype
    assert bool(jnp.array_equal(out, q))
    print("KERNEL_OK")
</pallas_src>

<mosaic_0001>
module attributes {stable_mosaic.version = 11 : i64} {
  func.func @_hbm_copy_kernel(%arg0: memref<2x4x8x32xf32, #tpu.memory_space<any>>, %arg1: memref<2x4x8x32xf32, #tpu.memory_space<any>>, %arg2: memref<!tpu.dma_semaphore, #tpu.memory_space<semaphore_mem>>) attributes {dimension_semantics = [], scalar_prefetch = 0 : i64, scratch_operands = 1 : i64, tpu.core_type = #tpu.core_type<tc>} {
    tpu.enqueue_dma source(%arg0 : memref<2x4x8x32xf32, #tpu.memory_space<any>>) target(%arg1 : memref<2x4x8x32xf32, #tpu.memory_space<any>>) target_semaphore(%arg2 : memref<!tpu.dma_semaphore, #tpu.memory_space<semaphore_mem>>)
    tpu.wait_dma2 semaphore(%arg2 : memref<!tpu.dma_semaphore, #tpu.memory_space<semaphore_mem>>) src(%arg0 : memref<2x4x8x32xf32, #tpu.memory_space<any>>) dst(%arg1 : memref<2x4x8x32xf32, #tpu.memory_space<any>>)
    return
  }
}

</mosaic_0001>

<llo_original>
// kernel: tpu_custom_call.1
$region0: #{tpu_custom_call.1}
  #allocation0 [shape = 'u32[]', space=smem, size = 0x4, offset = 0x4, fixed_abs, tag = 'smem constant byte address 0x4 - core index']
  #allocation1 [shape = 'u32[144,128]{1,0:T(1,128)}', space=vmem, size = 0x12000, scoped, tag = 'internal scratch']
  #allocation2 [shape = 's32[1]{0}', space=sflag, size = 0x4, scoped, tag = 'scratch operand']
  #allocation3 [shape = 's32[]', space=sflag, size = 0x4, offset = 0, fixed_abs, tag = 'sflag constant byte address 0x0 - dummy sync flag']
  #allocation4 [shape = 'u32[0]{0}', space=smem, size = 0, offset = 0, fixed_abs, tag = 'smem constant byte address 0x0 - null']
  %s0 = inlined_call_operand.hbm [shape: f32[2,4,8,32], index: 0, kind: input, shape index: {}]
  %s1 = inlined_call_operand.hbm [shape: f32[2,4,8,32], index: 1, kind: output, shape index: {}]
  %s2 = sld [smem:[#allocation0]]
  $region2: #{tpu_custom_call.1} parent=0
    _
  %s4 = ssub.s32 1, %s2
  %s5 = scalar_select 0, %s4, %s2
  %s7 = sshll.u32 1, 14
  %s8 = sxor.u32 4294967295, %s7
  %12 = dma.general %s0, 1024, %s1, [#allocation2], 131072, [#allocation4], 0, 0
  %s13 = smul.u32 2, 4
  %s14 = smul.u32 %s13, 8
  %s15 = smul.u32 %s14, 1
  %s16 = sshll.u32 %s15, 4
  %17 = dma.done [#allocation2], %s16
  %18 = vsyncmov [#allocation2]
  %s19 = vpop.sfrf %18
  %p20 = scmp.eq.s32.totalorder %s19, 0
  %p21 = pneg %p20
  %23 = shalt.err (%p21)

</llo_original>
